<compile_context>
chip_gen: v7x
topology: tpu7x:2x2x1
jax: 0.10.0
libtpu: 0.0.40
codegen_flags: <defaults>
</compile_context>

<pallas_src>
import functools

import jax
import jax.numpy as jnp
from jax import lax
from jax.experimental import pallas as pl
from jax.experimental.pallas import tpu as pltpu

_SUB = 256        # in-kernel row sub-chunk (bounds live vreg/VMEM pressure)
_MIN_TILE = 128   # don't shrink tiles below this just to split across cores


def _choose_tm(batch, block_rows):
    """Pick the per-grid-step row tile.

    Guarantees: tm <= batch; tm == batch (full-dim block) or tm % 16 == 0
    (f32/bf16 sublane packing); tm % _SUB == 0 whenever tm > _SUB so the
    in-kernel sub-chunk loop divides exactly; prefers >= 2 grid steps so v7x's
    two TensorCores both get work.
    """
    block_rows = max(16, int(block_rows))
    if batch <= min(_MIN_TILE, block_rows):
        return batch                                   # single full-dim block
    half = -(-batch // 2)                              # ceil(batch / 2)
    tm = min(block_rows, max(_MIN_TILE, half))
    if tm >= _SUB:
        tm -= tm % _SUB
    else:
        tm -= tm % 16
    return max(16, min(tm, batch))


def _make_mlp_kernel(num_hidden, sub_rows, num_sub, compute_dtype):
    """Fused MLP kernel for `num_hidden` Linear+ReLU layers + Linear(hidden->1).

    Ref order: x, [w_l, b_l] * num_hidden, w_out_row, b_out (SMEM), out.
    """

    def kernel(*refs):
        x_ref = refs[0]
        w_out_ref = refs[1 + 2 * num_hidden]           # (1, hidden) f32
        b_out_ref = refs[2 + 2 * num_hidden]           # (1,) f32 in SMEM
        o_ref = refs[3 + 2 * num_hidden]               # (tm, 1) f32

        # Hoist the tiny, VMEM-resident weights/biases out of the row loop
        # (JAX does not CSE broadcasts/loads inside loops).
        ws = [refs[1 + 2 * l][...] for l in range(num_hidden)]
        bs = [refs[2 + 2 * l][...].astype(jnp.float32) for l in range(num_hidden)]
        w_row = w_out_ref[...].astype(jnp.float32)     # (1, hidden)
        b_last = b_out_ref[0]                          # scalar

        def rows(r0):
            # In-kernel dtype cast: x arrives in its HBM dtype; the bf16 cast
            # rides free VPU slots underneath the DMA pipeline.
            h = x_ref[pl.ds(r0, sub_rows), :]
            for w, b in zip(ws, bs):
                # MXU matmul (bf16 operands, f32 accumulation).
                h = jnp.dot(h.astype(compute_dtype), w,
                            preferred_element_type=jnp.float32)
                # Bias + ReLU on the VPU in f32.
                h = jnp.maximum(h + b, 0.0)
            # Output layer (hidden -> 1): per-row dot product on the VPU/XLU
            # instead of a <1%-utilized MXU pass.
            y = jnp.sum(h * w_row, axis=-1, keepdims=True)   # (sub_rows, 1)
            o_ref[pl.ds(r0, sub_rows), :] = (y + b_last).astype(o_ref.dtype)

        if num_sub == 1:
            rows(0)
        else:
            def body(s, carry):
                rows(pl.multiple_of(s * sub_rows, sub_rows))
                return carry
            # Short fixed trip count -> unrolled for LLO scheduler visibility,
            # while keeping each sub-chunk's intermediates register-sized.
            lax.fori_loop(0, num_sub, body, None, unroll=True)

    return kernel


@functools.partial(jax.jit, static_argnames=("block_rows", "use_bf16"))
def torch_mlp_forward(x, params, *, block_rows=2048, use_bf16=True):
    """Fused MLP forward pass as a single batch-tiled Pallas TPU kernel.

    params = (hidden_layers, w_out, b_out) where hidden_layers is a list of
    (w, b) with w: (in, out), b: (1, out); w_out: (hidden, 1); b_out: (1, 1).
    x may be f32 or already bf16 (the kernel casts per sub-chunk either way).
    """
    hidden_layers, w_out, b_out = params
    batch, in_dim = x.shape
    hidden_dim = w_out.shape[0]
    out_dim = w_out.shape[1]
    if out_dim != 1:
        raise NotImplementedError("kernel assumes output_dim == 1 (module default)")

    compute_dtype = jnp.bfloat16 if use_bf16 else jnp.float32

    # ---- batch tiling (no padding; ragged last block) -----------------------
    tm = _choose_tm(batch, block_rows)
    sub = min(_SUB, tm)
    num_sub = max(1, tm // sub)        # exact by construction of _choose_tm
    grid = (pl.cdiv(batch, tm),)

    # ---- operands & specs ----------------------------------------------------
    args = [x]                         # NOTE: no wrapper-side cast of x
    in_specs = [pl.BlockSpec((tm, in_dim), lambda i: (i, 0))]
    for w, b in hidden_layers:
        args += [w.astype(compute_dtype), b.astype(jnp.float32)]
        # Constant index_map -> weights/biases stay VMEM-resident across steps.
        in_specs += [pl.BlockSpec(w.shape, lambda i: (0, 0)),
                     pl.BlockSpec(b.shape, lambda i: (0, 0))]

    # Output layer: row-vector weight in VMEM (f32, consumed by the VPU),
    # scalar bias in SMEM.
    w_out_row = w_out.reshape(1, hidden_dim).astype(jnp.float32)
    args += [w_out_row, b_out.reshape(-1).astype(jnp.float32)]
    in_specs += [pl.BlockSpec((1, hidden_dim), lambda i: (0, 0)),
                 pl.BlockSpec(memory_space=pltpu.MemorySpace.SMEM)]

    return pl.pallas_call(
        _make_mlp_kernel(len(hidden_layers), sub, num_sub, compute_dtype),
        grid=grid,
        in_specs=in_specs,
        out_specs=pl.BlockSpec((tm, 1), lambda i: (i, 0)),
        out_shape=jax.ShapeDtypeStruct((batch, 1), jnp.float32),
        compiler_params=pltpu.CompilerParams(
            dimension_semantics=("parallel",),
            vmem_limit_bytes=32 * 1024 * 1024),
    )(*args)


def init_params(key, input_dim=30, hidden_dim=16, output_dim=1, num_layers=2):
    """nn.Linear-style init: uniform(-1/sqrt(fan_in), 1/sqrt(fan_in))."""

    def linear_init(k, fan_in, fan_out):
        kw, kb = jax.random.split(k)
        bound = 1.0 / (fan_in ** 0.5)
        w = jax.random.uniform(kw, (fan_in, fan_out), jnp.float32, -bound, bound)
        b = jax.random.uniform(kb, (1, fan_out), jnp.float32, -bound, bound)
        return w, b

    keys = jax.random.split(key, num_layers + 1)
    hidden_layers = []
    fan_in = input_dim
    for l in range(num_layers):
        hidden_layers.append(linear_init(keys[l], fan_in, hidden_dim))
        fan_in = hidden_dim
    w_out, b_out = linear_init(keys[-1], hidden_dim, output_dim)
    return hidden_layers, w_out, b_out


def reference_forward(x, params, use_bf16=True):
    """Pure-JAX reference mirroring the kernel's bf16-in / f32-accumulate math."""
    hidden_layers, w_out, b_out = params
    cd = jnp.bfloat16 if use_bf16 else jnp.float32
    h = x
    for w, b in hidden_layers:
        h = jnp.dot(h.astype(cd), w.astype(cd), preferred_element_type=jnp.float32)
        h = jnp.maximum(h + b, 0.0)
    return jnp.sum(h * w_out.reshape(1, -1), axis=-1, keepdims=True) + b_out.reshape(1, -1)


if __name__ == "__main__":
    key = jax.random.PRNGKey(0)
    k_x, k_x2, k_x3, k_p = jax.random.split(key, 4)

    input_dim, hidden_dim, output_dim, num_layers = 30, 16, 1, 2
    params = init_params(k_p, input_dim, hidden_dim, output_dim, num_layers)

    # Tiny single-block case (batch=8, block == full array dims).
    x = jax.random.normal(k_x, (8, input_dim), jnp.float32)
    out = jax.block_until_ready(torch_mlp_forward(x, params))
    ref = reference_forward(x, params)
    assert out.shape == (8, output_dim)
    assert jnp.allclose(out, ref, atol=1e-4, rtol=1e-4)

    # Medium case: grid of 2 (v7x two-core split) with a ragged last block
    # (batch=200, tm=128 -> no jnp.pad, no output slice).
    x2 = jax.random.normal(k_x2, (200, input_dim), jnp.float32)
    out2 = jax.block_until_ready(torch_mlp_forward(x2, params))
    ref2 = reference_forward(x2, params)
    assert out2.shape == (200, output_dim)
    assert jnp.allclose(out2, ref2, atol=1e-4, rtol=1e-4)

    # Larger case exercising the in-kernel sub-chunk loop (tm=512, 2 sub-chunks)
    # plus a ragged last block (1200 % 512 = 176).
    x3 = jax.random.normal(k_x3, (1200, input_dim), jnp.float32)
    out3 = jax.block_until_ready(torch_mlp_forward(x3, params))
    ref3 = reference_forward(x3, params)
    assert out3.shape == (1200, output_dim)
    assert jnp.allclose(out3, ref3, atol=1e-4, rtol=1e-4)

    # Caller already has bf16 activations: passed straight through, no casts.
    x3_bf16 = x3.astype(jnp.bfloat16)
    out3b = jax.block_until_ready(torch_mlp_forward(x3_bf16, params))
    ref3b = reference_forward(x3_bf16.astype(jnp.float32), params)
    assert jnp.allclose(out3b, ref3b, atol=1e-4, rtol=1e-4)

    print("KERNEL_OK")
</pallas_src>

<mosaic_0001>
module attributes {stable_mosaic.version = 11 : i64} {
  func.func @kernel(%arg0: i32, %arg1: memref<8x30xf32, #tpu.memory_space<vmem>>, %arg2: memref<30x16xbf16, #tpu.memory_space<vmem>>, %arg3: memref<1x16xf32, #tpu.memory_space<vmem>>, %arg4: memref<16x16xbf16, #tpu.memory_space<vmem>>, %arg5: memref<1x16xf32, #tpu.memory_space<vmem>>, %arg6: memref<1x16xf32, #tpu.memory_space<vmem>>, %arg7: memref<1xf32, #tpu.memory_space<smem>>, %arg8: memref<8x1xf32, #tpu.memory_space<vmem>>) attributes {dimension_semantics = [#tpu.dimension_semantics<parallel>], iteration_bounds = array<i64: 1>, scalar_prefetch = 0 : i64, scratch_operands = 0 : i64, tpu.core_type = #tpu.core_type<tc>, window_params = [{transform_indices = @transform_0, window_bounds = array<i64: 8, 30>}, {pipeline_mode = #tpu.pipeline_mode<synchronous>, transform_indices = @transform_1, window_bounds = array<i64: 30, 16>}, {pipeline_mode = #tpu.pipeline_mode<synchronous>, transform_indices = @transform_2, window_bounds = array<i64: 1, 16>}, {pipeline_mode = #tpu.pipeline_mode<synchronous>, transform_indices = @transform_3, window_bounds = array<i64: 16, 16>}, {pipeline_mode = #tpu.pipeline_mode<synchronous>, transform_indices = @transform_4, window_bounds = array<i64: 1, 16>}, {pipeline_mode = #tpu.pipeline_mode<synchronous>, transform_indices = @transform_5, window_bounds = array<i64: 1, 16>}, {transform_indices = @transform_6, window_bounds = array<i64: 1>}, {transform_indices = @transform_7, window_bounds = array<i64: 8, 1>}]} {
    %c0 = arith.constant 0 : index
    %c0_0 = arith.constant 0 : index
    %0 = vector.load %arg2[%c0, %c0_0] : memref<30x16xbf16, #tpu.memory_space<vmem>>, vector<30x16xbf16>
    %c0_1 = arith.constant 0 : index
    %c0_2 = arith.constant 0 : index
    %1 = vector.load %arg4[%c0_1, %c0_2] : memref<16x16xbf16, #tpu.memory_space<vmem>>, vector<16x16xbf16>
    %c0_3 = arith.constant 0 : index
    %c0_4 = arith.constant 0 : index
    %2 = vector.load %arg3[%c0_3, %c0_4] : memref<1x16xf32, #tpu.memory_space<vmem>>, vector<1x16xf32>
    %c0_5 = arith.constant 0 : index
    %c0_6 = arith.constant 0 : index
    %3 = vector.load %arg5[%c0_5, %c0_6] : memref<1x16xf32, #tpu.memory_space<vmem>>, vector<1x16xf32>
    %c0_7 = arith.constant 0 : index
    %c0_8 = arith.constant 0 : index
    %4 = vector.load %arg6[%c0_7, %c0_8] : memref<1x16xf32, #tpu.memory_space<vmem>>, vector<1x16xf32>
    %c0_9 = arith.constant 0 : index
    %5 = memref.load %arg7[%c0_9] : memref<1xf32, #tpu.memory_space<smem>>
    %c0_10 = arith.constant 0 : index
    %c0_11 = arith.constant 0 : index
    %6 = vector.load %arg1[%c0_10, %c0_11] : memref<8x30xf32, #tpu.memory_space<vmem>>, vector<8x30xf32>
    %7 = arith.truncf %6 : vector<8x30xf32> to vector<8x30xbf16>
    %cst = arith.constant dense<0.000000e+00> : vector<8x16xf32>
    %8 = tpu.matmul %7, %0, %cst {dimension_numbers = #tpu.dot_dimension_numbers<[1], [0], [0], [1], [0, 0, 1, 1], [], []>} : vector<8x30xbf16>, vector<30x16xbf16>, vector<8x16xf32> -> vector<8x16xf32>
    %9 = vector.broadcast %2 : vector<1x16xf32> to vector<8x16xf32>
    %10 = arith.addf %8, %9 : vector<8x16xf32>
    %cst_12 = arith.constant 0.000000e+00 : f32
    %11 = vector.broadcast %cst_12 : f32 to vector<8x16xf32>
    %12 = arith.maximumf %10, %11 : vector<8x16xf32>
    %13 = arith.truncf %12 : vector<8x16xf32> to vector<8x16xbf16>
    %cst_13 = arith.constant dense<0.000000e+00> : vector<8x16xf32>
    %14 = tpu.matmul %13, %1, %cst_13 {dimension_numbers = #tpu.dot_dimension_numbers<[1], [0], [0], [1], [0, 0, 1, 1], [], []>} : vector<8x16xbf16>, vector<16x16xbf16>, vector<8x16xf32> -> vector<8x16xf32>
    %15 = vector.broadcast %3 : vector<1x16xf32> to vector<8x16xf32>
    %16 = arith.addf %14, %15 : vector<8x16xf32>
    %cst_14 = arith.constant 0.000000e+00 : f32
    %17 = vector.broadcast %cst_14 : f32 to vector<8x16xf32>
    %18 = arith.maximumf %16, %17 : vector<8x16xf32>
    %19 = vector.broadcast %4 : vector<1x16xf32> to vector<8x16xf32>
    %20 = arith.mulf %18, %19 : vector<8x16xf32>
    %cst_15 = arith.constant dense<0.000000e+00> : vector<8xf32>
    %21 = vector.multi_reduction <add>, %20, %cst_15 [1] : vector<8x16xf32> to vector<8xf32>
    %22 = vector.shape_cast %21 : vector<8xf32> to vector<8x1xf32>
    %23 = vector.broadcast %5 : f32 to vector<8x1xf32>
    %24 = arith.addf %22, %23 : vector<8x1xf32>
    %c0_16 = arith.constant 0 : index
    %c0_17 = arith.constant 0 : index
    %25 = vector.load %arg8[%c0_16, %c0_17] : memref<8x1xf32, #tpu.memory_space<vmem>>, vector<8x1xf32>
    tpu.vector_store %arg8[%c0_16, %c0_17], %24 {strides = array<i32>} : memref<8x1xf32, #tpu.memory_space<vmem>>, vector<8x1xf32>,
    return
  }
  func.func @transform_0(%arg0: i32) -> (i32, i32) {
    %c0_i32 = arith.constant 0 : i32
    %c0_i32_0 = arith.constant 0 : i32
    return %arg0, %c0_i32 : i32, i32
  }
  func.func @transform_1(%arg0: i32) -> (i32, i32) {
    %c0_i32 = arith.constant 0 : i32
    %c0_i32_0 = arith.constant 0 : i32
    %c0_i32_1 = arith.constant 0 : i32
    return %c0_i32, %c0_i32_0 : i32, i32
  }
  func.func @transform_2(%arg0: i32) -> (i32, i32) {
    %c0_i32 = arith.constant 0 : i32
    %c0_i32_0 = arith.constant 0 : i32
    %c0_i32_1 = arith.constant 0 : i32
    return %c0_i32, %c0_i32_0 : i32, i32
  }
  func.func @transform_3(%arg0: i32) -> (i32, i32) {
    %c0_i32 = arith.constant 0 : i32
    %c0_i32_0 = arith.constant 0 : i32
    %c0_i32_1 = arith.constant 0 : i32
    return %c0_i32, %c0_i32_0 : i32, i32
  }
  func.func @transform_4(%arg0: i32) -> (i32, i32) {
    %c0_i32 = arith.constant 0 : i32
    %c0_i32_0 = arith.constant 0 : i32
    %c0_i32_1 = arith.constant 0 : i32
    return %c0_i32, %c0_i32_0 : i32, i32
  }
  func.func @transform_5(%arg0: i32) -> (i32, i32) {
    %c0_i32 = arith.constant 0 : i32
    %c0_i32_0 = arith.constant 0 : i32
    %c0_i32_1 = arith.constant 0 : i32
    return %c0_i32, %c0_i32_0 : i32, i32
  }
  func.func @transform_6(%arg0: i32) -> i32 {
    %c0_i32 = arith.constant 0 : i32
    %c0_i32_0 = arith.constant 0 : i32
    return %c0_i32 : i32
  }
  func.func @transform_7(%arg0: i32) -> (i32, i32) {
    %c0_i32 = arith.constant 0 : i32
    %c0_i32_0 = arith.constant 0 : i32
    return %arg0, %c0_i32 : i32, i32
  }
}

</mosaic_0001>

<llo_original>
// kernel: torch_mlp_forward.1
$region0: #{torch_mlp_forward.1}
  #allocation0 [shape = 'u32[]', space=smem, size = 0x4, offset = 0x4, fixed_abs, tag = 'smem constant byte address 0x4 - core index']
  #allocation1 [shape = 'u32[144,128]{1,0:T(1,128)}', space=vmem, size = 0x12000, scoped, tag = 'internal scratch']
  #allocation2 [shape = 'f32[1]{0:T(128)S(6)}', space=smem, size = 0x200, scoped, tag = 'scoped memory for torch_mlp_forward.1']
  %s0 = inlined_call_operand.vmem [shape: f32[8,30], index: 0, kind: input, shape index: {}]
  %s1 = inlined_call_operand.vmem [shape: bf16[30,16], index: 1, kind: input, shape index: {}]
  %s2 = inlined_call_operand.vmem [shape: f32[1,16], index: 2, kind: input, shape index: {}]
  %s3 = inlined_call_operand.vmem [shape: bf16[16,16], index: 3, kind: input, shape index: {}]
  %s4 = inlined_call_operand.vmem [shape: f32[1,16], index: 4, kind: input, shape index: {}]
  %s5 = inlined_call_operand.vmem [shape: f32[1,16], index: 5, kind: input, shape index: {}]
  %s6 = inlined_call_operand.<no memory space> [shape: f32[1], index: 6, kind: input, shape index: {}]
  %s7 = inlined_call_operand.vmem [shape: f32[8,1], index: 7, kind: output, shape index: {}]
  %s8 = sld [smem:[#allocation0]]
  $region38: #{torch_mlp_forward.1} parent=0
    _
  %s10 = ssub.s32 1, %s8
  %s11 = scalar_select 0, %s10, %s8
  %12 = sst [smem:[#allocation2]] %s6
  // Predicated region
  $region2: #{torch_mlp_forward.1} parent=0 // pred_check
    _
  $region3: #{torch_mlp_forward.1} parent=0 // pred_check_branch
    %14 = sbr.rel (0) target = $region5
  $region4: #{torch_mlp_forward.1} parent=0 // pred_region
    _
  $region5: #{torch_mlp_forward.1} parent=0 // pred_fallthru
    _
  // Predicated region
  $region6: #{torch_mlp_forward.1} parent=0 // pred_check
    _
  $region7: #{torch_mlp_forward.1} parent=0 // pred_check_branch
    %16 = sbr.rel (0) target = $region9
  $region8: #{torch_mlp_forward.1} parent=0 // pred_region
    _
  $region9: #{torch_mlp_forward.1} parent=0 // pred_fallthru
    _
  // Predicated region
  $region10: #{torch_mlp_forward.1} parent=0 // pred_check
    _
  $region11: #{torch_mlp_forward.1} parent=0 // pred_check_branch
    %18 = sbr.rel (0) target = $region13
  $region12: #{torch_mlp_forward.1} parent=0 // pred_region
    _
  $region13: #{torch_mlp_forward.1} parent=0 // pred_fallthru
    _
  // Predicated region
  $region14: #{torch_mlp_forward.1} parent=0 // pred_check
    _
  $region15: #{torch_mlp_forward.1} parent=0 // pred_check_branch
    %20 = sbr.rel (0) target = $region17
  $region16: #{torch_mlp_forward.1} parent=0 // pred_region
    _
  $region17: #{torch_mlp_forward.1} parent=0 // pred_fallthru
    _
  // Predicated region
  $region18: #{torch_mlp_forward.1} parent=0 // pred_check
    _
  $region19: #{torch_mlp_forward.1} parent=0 // pred_check_branch
    %22 = sbr.rel (0) target = $region21
  $region20: #{torch_mlp_forward.1} parent=0 // pred_region
    _
  $region21: #{torch_mlp_forward.1} parent=0 // pred_fallthru
    _
  // Predicated region
  $region22: #{torch_mlp_forward.1} parent=0 // pred_check
    _
  $region23: #{torch_mlp_forward.1} parent=0 // pred_check_branch
    %24 = sbr.rel (0) target = $region25
  $region24: #{torch_mlp_forward.1} parent=0 // pred_region
    _
  $region25: #{torch_mlp_forward.1} parent=0 // pred_fallthru
    _
  // Predicated region
  $region26: #{torch_mlp_forward.1} parent=0 // pred_check
    _
  $region27: #{torch_mlp_forward.1} parent=0 // pred_check_branch
    %26 = sbr.rel (0) target = $region29
  $region28: #{torch_mlp_forward.1} parent=0 // pred_region
    _
  $region29: #{torch_mlp_forward.1} parent=0 // pred_fallthru
    _
  %v28 = vld [vmem:[%s1] sm:$0xf]
  %v29 = vld [vmem:[%s1 + $0x4] sm:$0xf]
  %v30 = vld [vmem:[%s1 + $0x8] sm:$0xf]
  %v31 = vld [vmem:[%s1 + $0xc] sm:$0x7]
  %v32 = vld [vmem:[%s3] sm:$0xf]
  %v33 = vld [vmem:[%s3 + $0x4] sm:$0xf]
  %v34 = vld [vmem:[%s2] sm:$0x1]
  %v35 = vld [vmem:[%s4] sm:$0x1]
  %v36 = vld [vmem:[%s5] sm:$0x1]
  %s37 = sld [smem:[#allocation2]]
  %v38 = vld [vmem:[%s0] sm:$0xff]
  %v39 = vpack.c.bf16 %v38, %v38
  %v41 = vlaneseq
  %v42 = vshrl.u32 %v41, 7
  %v43 = vsub.s32 0, %v42
  %v44 = vrot.slane %v34, %v43
  %v50 = vunpack.c.l.b16 %v28
  %v51 = vunpack.c.l.b16 %v29
  %v52 = vunpack.c.l.b16 %v30
  %v53 = vunpack.c.l.b16 %v31
  %v54 = vpack.c.b16 %v51, %v50
  %v55 = vpack.c.b16 %v53, %v52
  %vm57 = vcmask 244736
  %v59 = vsel %vm57, %v39, 0
  %vm61 = vcmask 1046528
  %v63 = vsel %vm61, %v55, 0
  %65 = vmatprep.subr.bf16.mxu0 0
  %66 = vmatpush1.bf16.msra.mxu0 %v54
  %67 = vmatprep.subr.bf16.mxu0 0
  %68 = vmatpush1.bf16.msra.mxu0 %v63
  %69 = vmatprep.subr.bf16.mxu0 0
  %70 = vmatpush1.bf16.msra.mxu0 0
  %71 = vmatprep.subr.bf16.mxu0 0
  %72 = vmatpush1.bf16.msra.mxu0 0
  %73 = vmatprep.subr.bf16.mxu0 0
  %74 = vmatpush1.bf16.msra.mxu0 0
  %75 = vmatprep.subr.bf16.mxu0 0
  %76 = vmatpush1.bf16.msra.mxu0 0
  %77 = vmatprep.subr.bf16.mxu0 0
  %78 = vmatpush1.bf16.msra.mxu0 0
  %79 = vmatprep.subr.bf16.mxu0 0
  %80 = vmatpush1.bf16.msra.mxu0 0
  %81 = vmatprep.subr.bf16.mxu0 0
  %82 = vmatpush1.bf16.msra.mxu0 0
  %83 = vmatprep.subr.bf16.mxu0 0
  %84 = vmatpush1.bf16.msra.mxu0 0
  %85 = vmatprep.subr.bf16.mxu0 0
  %86 = vmatpush1.bf16.msra.mxu0 0
  %87 = vmatprep.subr.bf16.mxu0 0
  %88 = vmatpush1.bf16.msra.mxu0 0
  %89 = vmatprep.subr.bf16.mxu0 0
  %90 = vmatpush1.bf16.msra.mxu0 0
  %91 = vmatprep.subr.bf16.mxu0 0
  %92 = vmatpush1.bf16.msra.mxu0 0
  %93 = vmatprep.subr.bf16.mxu0 0
  %94 = vmatpush1.bf16.msra.mxu0 0
  %95 = vmatprep.subr.bf16.mxu0 0
  %96 = vmatpush1.bf16.msra.mxu0 0
  %97 = vmatprep.mubr.bf16.mxu0 0
  %98 = vmatmul.mubr.bf16.gmra.mrb[0].mxu0 %v59
  %v99 = vpop.f32.mrb[0].mxu0
  %v100 = vadd.f32 %v44, %v99
  %v101 = vpop.f32.mrb[0].mxu0
  %v102 = vpop.f32.mrb[0].mxu0
  %v103 = vpop.f32.mrb[0].mxu0
  %104 = vdwg.mxu0
  %v105 = vmax.f32 %v100, 0.0
  %v106 = vpack.c.bf16 %v105, %v105
  %v108 = vlaneseq
  %v109 = vshrl.u32 %v108, 7
  %v110 = vsub.s32 0, %v109
  %v111 = vrot.slane %v35, %v110
  %v115 = vunpack.c.l.b16 %v32
  %v116 = vunpack.c.l.b16 %v33
  %v117 = vpack.c.b16 %v116, %v115
  %vm119 = vcmask 130048
  %v121 = vsel %vm119, %v106, 0
  %123 = vmatprep.subr.bf16.mxu0 0
  %124 = vmatpush1.bf16.msra.mxu0 %v117
  %125 = vmatprep.subr.bf16.mxu0 0
  %126 = vmatpush1.bf16.msra.mxu0 0
  %127 = vmatprep.subr.bf16.mxu0 0
  %128 = vmatpush1.bf16.msra.mxu0 0
  %129 = vmatprep.subr.bf16.mxu0 0
  %130 = vmatpush1.bf16.msra.mxu0 0
  %131 = vmatprep.subr.bf16.mxu0 0
  %132 = vmatpush1.bf16.msra.mxu0 0
  %133 = vmatprep.subr.bf16.mxu0 0
  %134 = vmatpush1.bf16.msra.mxu0 0
  %135 = vmatprep.subr.bf16.mxu0 0
  %136 = vmatpush1.bf16.msra.mxu0 0
  %137 = vmatprep.subr.bf16.mxu0 0
  %138 = vmatpush1.bf16.msra.mxu0 0
  %139 = vmatprep.subr.bf16.mxu0 0
  %140 = vmatpush1.bf16.msra.mxu0 0
  %141 = vmatprep.subr.bf16.mxu0 0
  %142 = vmatpush1.bf16.msra.mxu0 0
  %143 = vmatprep.subr.bf16.mxu0 0
  %144 = vmatpush1.bf16.msra.mxu0 0
  %145 = vmatprep.subr.bf16.mxu0 0
  %146 = vmatpush1.bf16.msra.mxu0 0
  %147 = vmatprep.subr.bf16.mxu0 0
  %148 = vmatpush1.bf16.msra.mxu0 0
  %149 = vmatprep.subr.bf16.mxu0 0
  %150 = vmatpush1.bf16.msra.mxu0 0
  %151 = vmatprep.subr.bf16.mxu0 0
  %152 = vmatpush1.bf16.msra.mxu0 0
  %153 = vmatprep.subr.bf16.mxu0 0
  %154 = vmatpush1.bf16.msra.mxu0 0
  %155 = vmatprep.mubr.bf16.mxu0 0
  %156 = vmatmul.mubr.bf16.gmra.mrb[0].mxu0 %v121
  %v157 = vpop.f32.mrb[0].mxu0
  %v158 = vadd.f32 %v111, %v157
  %v159 = vpop.f32.mrb[0].mxu0
  %v160 = vpop.f32.mrb[0].mxu0
  %v161 = vpop.f32.mrb[0].mxu0
  %162 = vdwg.mxu0
  %v163 = vmax.f32 %v158, 0.0
  %v165 = vlaneseq
  %v166 = vshrl.u32 %v165, 7
  %v167 = vsub.s32 0, %v166
  %v168 = vrot.slane %v36, %v167
  %v170 = vmul.f32 %v163, %v168
  %v171 = vsel %vm119, %v170, 0.0
  %172 = vadd.xlane.f32.xlu0 %v171
  %v173 = vpop.xlane.xlu0 %172
  %v174 = vstv %s37
  %v175 = vadd.f32 %v173, %v174
  %vm176 = vcmask 7168
  %177 = vst.msk [vmem:[%s7] sm:$0xff] %vm176, %v175
  // Predicated region
  $region30: #{torch_mlp_forward.1} parent=0 // pred_check
    _
  $region31: #{torch_mlp_forward.1} parent=0 // pred_check_branch
    %179 = sbr.rel (0) target = $region33
  $region32: #{torch_mlp_forward.1} parent=0 // pred_region
    _
  $region33: #{torch_mlp_forward.1} parent=0 // pred_fallthru
    _
  // Predicated region
  $region34: #{torch_mlp_forward.1} parent=0 // pred_check
    _
  $region35: #{torch_mlp_forward.1} parent=0 // pred_check_branch
    %181 = sbr.rel (0) target = $region37
  $region36: #{torch_mlp_forward.1} parent=0 // pred_region
    _
  $region37: #{torch_mlp_forward.1} parent=0 // pred_fallthru
    _

</llo_original>
